<compile_context>
chip_gen: v7x
topology: tpu7x:2x2x1
jax: 0.10.0
libtpu: 0.0.40
codegen_flags: <defaults>
</compile_context>

<pallas_src>
import functools

import numpy as np

import jax
import jax.numpy as jnp
from jax.experimental import pallas as pl
from jax.experimental.pallas import tpu as pltpu


def _round_up(x, m):
    return ((x + m - 1) // m) * m


def _cdiv(a, b):
    return (a + b - 1) // b


# ----------------------------------------------------------------------------
# Kernel body: streaming MXU matmul with a K-reduction accumulator.
# ----------------------------------------------------------------------------
def _ridge_fwd_kernel(x_ref, w_ref, b_ref, o_ref, acc_ref):
    # x_ref  : (BM, TK)  row/feature tile of X (f32 or bf16)
    # w_ref  : (TK, Cp)  folded ridge-weight tile (normalization folded in)
    # b_ref  : (1,  Cp)  folded bias row (ones column + mean shift folded in)
    # o_ref  : (BM, Cp)  predictions tile
    # acc_ref: (BM, Cp)  f32 VMEM accumulator, resident across the K axis
    k = pl.program_id(1)

    @pl.when(k == 0)
    def _():
        acc_ref[...] = jnp.zeros_like(acc_ref)

    acc_ref[...] += jnp.dot(
        x_ref[...], w_ref[...], preferred_element_type=jnp.float32
    )

    @pl.when(k == pl.num_programs(1) - 1)
    def _():
        o_ref[...] = (acc_ref[...] + b_ref[...]).astype(o_ref.dtype)


# ----------------------------------------------------------------------------
# Tile selection: fit the working set inside the per-core VMEM budget.
# ----------------------------------------------------------------------------
def _fit_vmem(bm, d, c_pad, x_bytes, w_bytes, out_bytes, vmem_budget, align):
    """Pick (bm, tk) so the double-buffered working set fits `vmem_budget`."""

    def use(bm_, tk_):
        return (
            2 * bm_ * tk_ * x_bytes        # double-buffered X tile
            + 2 * tk_ * c_pad * w_bytes    # W tile (grid-invariant, still 2-buf)
            + 2 * c_pad * 4                # bias row
            + 2 * bm_ * c_pad * out_bytes  # double-buffered output tile
            + bm_ * c_pad * 4              # f32 accumulator scratch
        )

    while True:
        if use(bm, d) <= vmem_budget:
            return bm, d                   # whole feature dim resident -> 1 K step
        denom = 2 * bm * x_bytes + 2 * c_pad * w_bytes
        fixed = 2 * c_pad * 4 + 2 * bm * c_pad * out_bytes + bm * c_pad * 4
        tk_cap = (vmem_budget - fixed) // denom if vmem_budget > fixed else 0
        tk = (tk_cap // 256) * 256         # MXU-depth-aligned K tile
        if tk >= 256:
            return bm, tk
        if bm <= align:                    # last resort: smallest legal tiles
            return align, (256 if d >= 256 else d)
        bm = _round_up(max(align, bm // 2), align)


# ----------------------------------------------------------------------------
# Forward wrapper.
# ----------------------------------------------------------------------------
@functools.partial(
    jax.jit,
    static_argnames=("block_rows", "feature_block", "in_dtype", "out_dtype"),
)
def ridge_forward_pallas(
    x,
    w_folded,
    bias,
    *,
    block_rows=None,
    feature_block=None,
    in_dtype=jnp.float32,
    out_dtype=jnp.float32,
):
    """x: (N, D), w_folded: (D, C), bias: (1, C) -> predictions (N, C)."""
    n, d = x.shape
    c = w_folded.shape[1]

    in_dt = np.dtype(in_dtype)
    out_dt = np.dtype(out_dtype)

    # Lane-dense output: pad the class dim to a multiple of 128 (unmasked vst).
    c_pad = _round_up(c, 128)

    # Generation-aware VMEM budget (v5e/v6e: 128 MiB; v7x: 64 MiB per core).
    try:
        vmem_cap = int(pltpu.get_tpu_info().vmem_capacity_bytes)
    except Exception:  # e.g. interpret mode on a non-TPU host
        vmem_cap = 64 << 20
    vmem_budget = max(vmem_cap - (16 << 20), 8 << 20)  # compiler headroom

    if block_rows is None:
        block_rows = 1024 if vmem_cap >= (96 << 20) else 512

    # Sublane alignment for the row tile (8 f32 / 16 bf16 / 32 int8).
    align = max(8, 32 // in_dt.itemsize)

    # Large row tile to amortize per-grid-step overhead, but capped at
    # ceil(n/2) so the "parallel" row axis has >= 2 steps (keeps both
    # TensorCores busy on v7x even for small batches).
    bm = _round_up(max(min(block_rows, _round_up(_cdiv(n, 2), align)), align), align)

    if feature_block is not None:
        tk = int(feature_block)
    else:
        bm, tk = _fit_vmem(
            bm, d, c_pad, in_dt.itemsize, in_dt.itemsize, out_dt.itemsize,
            vmem_budget, align,
        )

    n_pad = _round_up(n, bm)
    d_pad = _round_up(d, tk)
    nk = d_pad // tk

    # Pad / cast operands.  Zero-padded tail rows evaluate to `bias` and are
    # sliced off; zero-padded feature columns contribute nothing to the dot.
    # allow_input_fusion below lets XLA fuse this pad/cast into the kernel's X
    # operand instead of writing a padded copy of X back to HBM.
    x_in = x.astype(in_dt)
    if (n_pad, d_pad) != (n, d):
        x_in = jnp.pad(x_in, ((0, n_pad - n), (0, d_pad - d)))
    w_in = w_folded.astype(in_dt)
    if (d_pad, c_pad) != (d, c):
        w_in = jnp.pad(w_in, ((0, d_pad - d), (0, c_pad - c)))
    b_in = bias.astype(jnp.float32)
    if c_pad != c:
        b_in = jnp.pad(b_in, ((0, 0), (0, c_pad - c)))

    use_bytes = (
        2 * bm * tk * in_dt.itemsize
        + 2 * tk * c_pad * in_dt.itemsize
        + 2 * c_pad * 4
        + 2 * bm * c_pad * out_dt.itemsize
        + bm * c_pad * 4
    )
    vmem_limit = int(min(vmem_cap, max(2 * use_bytes, 32 << 20)))

    cost = pl.CostEstimate(
        flops=2 * n_pad * d_pad * c_pad,
        transcendentals=0,
        bytes_accessed=(
            n_pad * d_pad * in_dt.itemsize
            + d_pad * c_pad * in_dt.itemsize
            + c_pad * 4
            + n_pad * c_pad * out_dt.itemsize
        ),
    )

    out = pl.pallas_call(
        _ridge_fwd_kernel,
        out_shape=jax.ShapeDtypeStruct((n_pad, c_pad), out_dt),
        grid_spec=pltpu.PrefetchScalarGridSpec(
            num_scalar_prefetch=0,
            grid=(n_pad // bm, nk),
            in_specs=[
                pl.BlockSpec((bm, tk), lambda i, k: (i, k)),
                # TODO(synk): mark W / bias with pipeline_mode=pl.Buffered(1)
                # (grid-invariant blocks) once single-buffering is supported on
                # the top-level pallas_call pipeline; frees one tk*c_pad buffer
                # of VMEM, most valuable on v7x at large D.
                pl.BlockSpec((tk, c_pad), lambda i, k: (k, 0)),
                pl.BlockSpec((1, c_pad), lambda i, k: (0, 0)),
            ],
            out_specs=pl.BlockSpec((bm, c_pad), lambda i, k: (i, 0)),
            scratch_shapes=[pltpu.VMEM((bm, c_pad), jnp.float32)],
        ),
        compiler_params=pltpu.CompilerParams(
            dimension_semantics=("parallel", "arbitrary"),
            vmem_limit_bytes=vmem_limit,
            allow_input_fusion=(True, False, False),
        ),
        cost_estimate=cost,
    )(x_in, w_in, b_in)

    # TODO(synk): for large-N deployments with C << 128, keep the (n_pad,c_pad)
    # buffer and slice lazily downstream (or emit bf16 output) to avoid this
    # extra writeback/copy pass.
    return out[:n, :c]


# ----------------------------------------------------------------------------
# Fit (closed form, plain JAX -- not the hot forward path) + weight folding.
# ----------------------------------------------------------------------------
def ridge_fit_closed_form(x, y, num_classes, alpha=1.0, mode=None):
    """Closed-form ridge fit. Returns (beta (D+1,C), mean (1,D+1), inv_scale (1,D+1))."""
    n = x.shape[0]
    x_aug = jnp.concatenate([x, jnp.ones((n, 1), dtype=x.dtype)], axis=1)

    if mode == "normalize":
        mean = jnp.mean(x_aug, axis=0, keepdims=True)
        scale = jnp.linalg.norm(x_aug, axis=0, keepdims=True)
    elif mode == "standardize":
        mean = jnp.mean(x_aug, axis=0, keepdims=True)
        scale = jnp.std(x_aug, axis=0, ddof=1, keepdims=True)
    else:
        mean = jnp.zeros((1, x_aug.shape[1]), dtype=x.dtype)
        scale = jnp.ones((1, x_aug.shape[1]), dtype=x.dtype)

    # Guard zero scales (std of the appended ones column is exactly 0), which
    # would otherwise poison beta and the folded bias with inf/NaN.  The same
    # guarded scale is used by the reference forward, so both paths agree.
    scale = jnp.where(scale > 1e-8, scale, jnp.ones_like(scale))
    x_fit = (x_aug - mean) / scale

    y_onehot = jax.nn.one_hot(y, num_classes, dtype=jnp.float32)
    d1 = x_aug.shape[1]
    gram = x_fit.T @ x_fit + alpha * jnp.eye(d1, dtype=jnp.float32)
    beta = jnp.linalg.pinv(gram) @ x_fit.T @ y_onehot  # (D+1, C)
    return beta, mean, 1.0 / scale


def fold_forward_params(beta, mean, inv_scale):
    """Fold normalization + ones-column bias into (W_folded (D,C), bias (1,C))."""
    w_full = inv_scale.reshape(-1, 1) * beta            # (D+1, C)
    bias = w_full[-1:, :] - jnp.dot(
        mean * inv_scale, beta, precision=jax.lax.Precision.HIGHEST
    )                                                   # (1, C)
    return w_full[:-1, :], bias


def ridge_forward_reference(x, beta, mean, inv_scale):
    """Plain-JAX mirror of the PyTorch forward (unfolded evaluation order)."""
    n = x.shape[0]
    x_aug = jnp.concatenate([x, jnp.ones((n, 1), dtype=x.dtype)], axis=1)
    return jnp.dot(
        (x_aug - mean) * inv_scale, beta, precision=jax.lax.Precision.HIGHEST
    )


if __name__ == "__main__":
    key = jax.random.PRNGKey(0)
    k_x, k_y, k_xt, k_x2, k_xt2 = jax.random.split(key, 5)

    alpha = 1.0
    N_FIT, N, D, C = 16, 10, 32, 4  # N=10 exercises the padded-tail path
    D_BIG = 256                     # exercises the K-tiled (nk > 1) path

    x_fit = jax.random.normal(k_x, (N_FIT, D), dtype=jnp.float32)
    y_fit = jax.random.randint(k_y, (N_FIT,), 0, C)
    x_test = jax.random.normal(k_xt, (N, D), dtype=jnp.float32)

    ok = True
    for mode in (None, "normalize", "standardize"):
        beta, mean, inv_scale = ridge_fit_closed_form(
            x_fit, y_fit, num_classes=C, alpha=alpha, mode=mode
        )
        w_folded, bias = fold_forward_params(beta, mean, inv_scale)
        ref = ridge_forward_reference(x_test, beta, mean, inv_scale)

        # f32 path: matches the module numerics (the fold only reassociates).
        out = jax.block_until_ready(ridge_forward_pallas(x_test, w_folded, bias))
        if out.shape != (N, C) or not jnp.allclose(out, ref, atol=1e-3, rtol=1e-3):
            ok = False
            print(f"f32 mismatch vs reference for mode={mode!r}")

        # bf16-input fast path (f32 accumulation): looser tolerance.
        out_bf16 = jax.block_until_ready(
            ridge_forward_pallas(x_test, w_folded, bias, in_dtype=jnp.bfloat16)
        )
        if out_bf16.shape != (N, C) or not jnp.allclose(
            out_bf16, ref, atol=5e-2, rtol=5e-2
        ):
            ok = False
            print(f"bf16 mismatch vs reference for mode={mode!r}")

    # K-tiled reduction path (feature_block forces more than one K step).
    x_fit2 = jax.random.normal(k_x2, (N_FIT, D_BIG), dtype=jnp.float32)
    x_test2 = jax.random.normal(k_xt2, (N, D_BIG), dtype=jnp.float32)
    beta2, mean2, inv_scale2 = ridge_fit_closed_form(
        x_fit2, y_fit, num_classes=C, alpha=alpha, mode="normalize"
    )
    w2, b2 = fold_forward_params(beta2, mean2, inv_scale2)
    ref2 = ridge_forward_reference(x_test2, beta2, mean2, inv_scale2)
    out2 = jax.block_until_ready(
        ridge_forward_pallas(x_test2, w2, b2, feature_block=128)
    )
    if out2.shape != (N, C) or not jnp.allclose(out2, ref2, atol=1e-3, rtol=1e-3):
        ok = False
        print("f32 mismatch vs reference for K-tiled path")

    assert ok, "kernel output mismatch"
    print("KERNEL_OK")
</pallas_src>

<mosaic_0001>
module attributes {stable_mosaic.version = 11 : i64} {
  func.func @_ridge_fwd_kernel(%arg0: i32, %arg1: i32, %arg2: memref<8x32xf32, #tpu.memory_space<vmem>>, %arg3: memref<32x128xf32, #tpu.memory_space<vmem>>, %arg4: memref<1x128xf32, #tpu.memory_space<vmem>>, %arg5: memref<8x128xf32, #tpu.memory_space<vmem>>, %arg6: memref<8x128xf32, #tpu.memory_space<vmem>>) attributes {dimension_semantics = [#tpu.dimension_semantics<parallel>, #tpu.dimension_semantics<arbitrary>], iteration_bounds = array<i64: 2, 1>, scalar_prefetch = 0 : i64, scratch_operands = 1 : i64, tpu.core_type = #tpu.core_type<tc>, window_params = [{transform_indices = @transform_0, window_bounds = array<i64: 8, 32>}, {transform_indices = @transform_1, window_bounds = array<i64: 32, 128>}, {pipeline_mode = #tpu.pipeline_mode<synchronous>, transform_indices = @transform_2, window_bounds = array<i64: 1, 128>}, {transform_indices = @transform_3, window_bounds = array<i64: 8, 128>}]} {
    %c0_i32 = arith.constant 0 : i32
    %0 = arith.cmpi eq, %arg1, %c0_i32 : i32
    %1 = arith.extui %0 : i1 to i32
    %c0_i32_0 = arith.constant 0 : i32
    %2 = arith.cmpi ne, %1, %c0_i32_0 : i32
    scf.if %2 {
      %cst_10 = arith.constant 0.000000e+00 : f32
      %12 = vector.broadcast %cst_10 : f32 to vector<8x128xf32>
      %c0_11 = arith.constant 0 : index
      %c0_12 = arith.constant 0 : index
      %13 = vector.load %arg6[%c0_11, %c0_12] : memref<8x128xf32, #tpu.memory_space<vmem>>, vector<8x128xf32>
      tpu.vector_store %arg6[%c0_11, %c0_12], %12 {strides = array<i32>} : memref<8x128xf32, #tpu.memory_space<vmem>>, vector<8x128xf32>,
    } else {
    }
    %c0 = arith.constant 0 : index
    %c0_1 = arith.constant 0 : index
    %3 = vector.load %arg6[%c0, %c0_1] : memref<8x128xf32, #tpu.memory_space<vmem>>, vector<8x128xf32>
    %c0_2 = arith.constant 0 : index
    %c0_3 = arith.constant 0 : index
    %4 = vector.load %arg2[%c0_2, %c0_3] : memref<8x32xf32, #tpu.memory_space<vmem>>, vector<8x32xf32>
    %c0_4 = arith.constant 0 : index
    %c0_5 = arith.constant 0 : index
    %5 = vector.load %arg3[%c0_4, %c0_5] : memref<32x128xf32, #tpu.memory_space<vmem>>, vector<32x128xf32>
    %cst = arith.constant dense<0.000000e+00> : vector<8x128xf32>
    %6 = tpu.matmul %4, %5, %cst {dimension_numbers = #tpu.dot_dimension_numbers<[1], [0], [0], [1], [0, 0, 1, 1], [], []>} : vector<8x32xf32>, vector<32x128xf32>, vector<8x128xf32> -> vector<8x128xf32>
    %7 = arith.addf %3, %6 : vector<8x128xf32>
    %c0_6 = arith.constant 0 : index
    %c0_7 = arith.constant 0 : index
    %8 = vector.load %arg6[%c0_6, %c0_7] : memref<8x128xf32, #tpu.memory_space<vmem>>, vector<8x128xf32>
    tpu.vector_store %arg6[%c0_6, %c0_7], %7 {strides = array<i32>} : memref<8x128xf32, #tpu.memory_space<vmem>>, vector<8x128xf32>,
    %c0_i32_8 = arith.constant 0 : i32
    %9 = arith.cmpi eq, %arg1, %c0_i32_8 : i32
    %10 = arith.extui %9 : i1 to i32
    %c0_i32_9 = arith.constant 0 : i32
    %11 = arith.cmpi ne, %10, %c0_i32_9 : i32
    scf.if %11 {
      %c0_10 = arith.constant 0 : index
      %c0_11 = arith.constant 0 : index
      %12 = vector.load %arg6[%c0_10, %c0_11] : memref<8x128xf32, #tpu.memory_space<vmem>>, vector<8x128xf32>
      %c0_12 = arith.constant 0 : index
      %c0_13 = arith.constant 0 : index
      %13 = vector.load %arg4[%c0_12, %c0_13] : memref<1x128xf32, #tpu.memory_space<vmem>>, vector<1x128xf32>
      %14 = vector.broadcast %13 : vector<1x128xf32> to vector<8x128xf32>
      %15 = arith.addf %12, %14 : vector<8x128xf32>
      %c0_14 = arith.constant 0 : index
      %c0_15 = arith.constant 0 : index
      %16 = vector.load %arg5[%c0_14, %c0_15] : memref<8x128xf32, #tpu.memory_space<vmem>>, vector<8x128xf32>
      tpu.vector_store %arg5[%c0_14, %c0_15], %15 {strides = array<i32>} : memref<8x128xf32, #tpu.memory_space<vmem>>, vector<8x128xf32>,
    } else {
    }
    return
  }
  func.func @transform_0(%arg0: i32, %arg1: i32) -> (i32, i32) {
    %c0_i32 = arith.constant 0 : i32
    return %arg0, %arg1 : i32, i32
  }
  func.func @transform_1(%arg0: i32, %arg1: i32) -> (i32, i32) {
    %c0_i32 = arith.constant 0 : i32
    %c0_i32_0 = arith.constant 0 : i32
    return %arg1, %c0_i32 : i32, i32
  }
  func.func @transform_2(%arg0: i32, %arg1: i32) -> (i32, i32) {
    %c0_i32 = arith.constant 0 : i32
    %c0_i32_0 = arith.constant 0 : i32
    %c0_i32_1 = arith.constant 0 : i32
    return %c0_i32, %c0_i32_0 : i32, i32
  }
  func.func @transform_3(%arg0: i32, %arg1: i32) -> (i32, i32) {
    %c0_i32 = arith.constant 0 : i32
    %c0_i32_0 = arith.constant 0 : i32
    return %arg0, %c0_i32 : i32, i32
  }
}

</mosaic_0001>

<llo_original>
// kernel: ridge_forward_pallas.2
$region0: #{ridge_forward_pallas.2}
  #allocation0 [shape = 'u32[]', space=smem, size = 0x4, offset = 0x4, fixed_abs, tag = 'smem constant byte address 0x4 - core index']
  #allocation1 [shape = 'u32[144,128]{1,0:T(1,128)}', space=vmem, size = 0x12000, scoped, tag = 'internal scratch']
  #allocation2 [shape = 'f32[8,128]{1,0:T(8,128)}', space=vmem, size = 0x1000, scoped, tag = 'scratch operand']
  #allocation3 [shape = 'u32[2048]{0}', space=vmem, size = 0x2000, scoped, tag = 'scoped memory for ridge_forward_pallas.2']
  #allocation4 [shape = 'u32[2048]{0}', space=vmem, size = 0x2000, scoped, tag = 'scoped memory for ridge_forward_pallas.2']
  #allocation5 [shape = 'u32[2048]{0}', space=vmem, size = 0x2000, scoped, tag = 'scoped memory for ridge_forward_pallas.2']
  #allocation6 [shape = 'u32[2048]{0}', space=vmem, size = 0x2000, scoped, tag = 'scoped memory for ridge_forward_pallas.2']
  #allocation7 [shape = 'u32[2048]{0}', space=vmem, size = 0x2000, scoped, tag = 'scoped memory for ridge_forward_pallas.2']
  %s0 = inlined_call_operand.vmem [shape: f32[32,128], index: 0, kind: input, shape index: {}]
  %s1 = inlined_call_operand.vmem [shape: f32[1,128], index: 1, kind: input, shape index: {}]
  %s2 = inlined_call_operand.vmem [shape: f32[10,32], index: 2, kind: input, shape index: {}]
  %s3 = inlined_call_operand.<no memory space> [shape: f32[], index: 3, kind: input, shape index: {}]
  %s4 = inlined_call_operand.vmem [shape: f32[16,128], index: 4, kind: output, shape index: {}]
  %s5 = sld [smem:[#allocation0]]
  $region53: #{ridge_forward_pallas.2} parent=0
    _
  %s7 = ssub.s32 1, %s5
  %s8 = scalar_select 0, %s7, %s5
  %v9 = vstv %s3
  loop: start=0, step=1, limit=4
  $region2: #{ridge_forward_pallas.2} parent=0 // loop_pre_header
    _
  $region3: #{ridge_forward_pallas.2} parent=0 // loop_header
    %s11 = sphi 0, %s15
    %p12 = scmp.ge.s32.totalorder %s11, 4
    %s18 = sphi 0, %s30
    %s19 = sphi 0, %s26
    %s20 = sphi 0, %s18
    %s21 = sphi 0, %s19
    %s22 = sphi 0, %s20
    %s23 = sphi 0, %s21
    %s35 = sphi 0, %s37
    %s38 = sphi 0, %s35
    %s39 = sphi 0, %s38
    %s55 = sphi 0, %s39
    %s61 = sphi 0, %s63
    %s64 = sphi 0, %s61
    %s65 = sphi 0, %s64
    %s81 = sphi 0, %s65
    %s85 = sphi 0, %s85
    %s87 = sphi 0, %s85
    %s88 = sphi 0, %s87
    %s102 = sphi 0, %s88
    %s108 = sphi 0, %s110
    %s111 = sphi 0, %s108
    %s112 = sphi 0, %s111
    %s128 = sphi 0, %s112
  $region4: #{ridge_forward_pallas.2} parent=0 // loop_header_branch
    %14 = sbr.rel (%p12) target = $region8
  $region5: #{ridge_forward_pallas.2} parent=0 // loop_body
    %s16 = ssub.s32 %s11, 1
    %s17 = ssub.s32 %s11, 2
    %s24 = sadd.s32 1, %s19
    %p25 = scmp.ge.s32.totalorder %s24, 1
    %s26 = scalar_select %p25, 0, %s24
    %s27 = sadd.s32 1, %s18
    %s28 = scalar_select %p25, %s27, %s18
    %p29 = scmp.ge.s32.totalorder %s28, 2
    %s30 = scalar_select %p29, 0, %s28
    %s31 = ssub.s32 %s18, %s30
    %s32 = ssub.s32 %s19, %s26
    %s33 = sor.u32 %s31, %s32
    %p34 = scmp.eq.s32.totalorder %s33, 0
    %s36 = sadd.s32 %s35, 1
    %s37 = scalar_select %p34, %s35, %s36
    %p40 = pneg %p34
    %p41 = scmp.eq.s32.totalorder %s11, 1
    %p42 = por %p40, %p41
    %p43 = scmp.ne.s32.totalorder %s35, %s38
    %p44 = scmp.eq.s32.totalorder %s11, 0
    %p45 = por %p43, %p44
    %p46 = scmp.ne.s32.totalorder %s35, %s38
    %p47 = scmp.eq.s32.totalorder %s16, 1
    %p48 = por %p46, %p47
    %p49 = scmp.ne.s32.totalorder %s38, %s39
    %p50 = scmp.eq.s32.totalorder %s16, 0
    %p51 = por %p49, %p50
    %p52 = scmp.ne.s32.totalorder %s38, %s39
    %p53 = scmp.eq.s32.totalorder %s17, 1
    %p54 = por %p52, %p53
    %p56 = scmp.ne.s32.totalorder %s39, %s55
    %p57 = scmp.eq.s32.totalorder %s17, 0
    %p58 = por %p56, %p57
    %s59 = ssub.s32 %s19, %s26
    %p60 = scmp.eq.s32.totalorder %s59, 0
    %s62 = sadd.s32 %s61, 1
    %s63 = scalar_select %p60, %s61, %s62
    %p66 = pneg %p60
    %p67 = scmp.eq.s32.totalorder %s11, 1
    %p68 = por %p66, %p67
    %p69 = scmp.ne.s32.totalorder %s61, %s64
    %p70 = scmp.eq.s32.totalorder %s11, 0
    %p71 = por %p69, %p70
    %p72 = scmp.ne.s32.totalorder %s61, %s64
    %p73 = scmp.eq.s32.totalorder %s16, 1
    %p74 = por %p72, %p73
    %p75 = scmp.ne.s32.totalorder %s64, %s65
    %p76 = scmp.eq.s32.totalorder %s16, 0
    %p77 = por %p75, %p76
    %p78 = scmp.ne.s32.totalorder %s64, %s65
    %p79 = scmp.eq.s32.totalorder %s17, 1
    %p80 = por %p78, %p79
    %p82 = scmp.ne.s32.totalorder %s65, %s81
    %p83 = scmp.eq.s32.totalorder %s17, 0
    %p84 = por %p82, %p83
    %s86 = sadd.s32 %s85, 1
    %p89 = scmp.eq.s32.totalorder %s11, 1
    %p90 = scmp.ne.s32.totalorder %s85, %s87
    %p91 = scmp.eq.s32.totalorder %s11, 0
    %p92 = por %p90, %p91
    %p93 = scmp.ne.s32.totalorder %s85, %s87
    %p94 = scmp.eq.s32.totalorder %s16, 1
    %p95 = por %p93, %p94
    %p96 = scmp.ne.s32.totalorder %s87, %s88
    %p97 = scmp.eq.s32.totalorder %s16, 0
    %p98 = por %p96, %p97
    %p99 = scmp.ne.s32.totalorder %s87, %s88
    %p100 = scmp.eq.s32.totalorder %s17, 1
    %p101 = por %p99, %p100
    %p103 = scmp.ne.s32.totalorder %s88, %s102
    %p104 = scmp.eq.s32.totalorder %s17, 0
    %p105 = por %p103, %p104
    %s106 = ssub.s32 %s18, %s30
    %p107 = scmp.eq.s32.totalorder %s106, 0
    %s109 = sadd.s32 %s108, 1
    %s110 = scalar_select %p107, %s108, %s109
    %p113 = pneg %p107
    %p114 = scmp.eq.s32.totalorder %s11, 1
    %p115 = por %p113, %p114
    %p116 = scmp.ne.s32.totalorder %s108, %s111
    %p117 = scmp.eq.s32.totalorder %s11, 0
    %p118 = por %p116, %p117
    %p119 = scmp.ne.s32.totalorder %s108, %s111
    %p120 = scmp.eq.s32.totalorder %s16, 1
    %p121 = por %p119, %p120
    %p122 = scmp.ne.s32.totalorder %s111, %s112
    %p123 = scmp.eq.s32.totalorder %s16, 0
    %p124 = por %p122, %p123
    %p125 = scmp.ne.s32.totalorder %s111, %s112
    %p126 = scmp.eq.s32.totalorder %s17, 1
    %p127 = por %p125, %p126
    %p129 = scmp.ne.s32.totalorder %s112, %s128
    %p130 = scmp.eq.s32.totalorder %s17, 0
    %p131 = por %p129, %p130
    %p132 = scmp.le.s32.totalorder 1, %s11
    %p133 = scmp.lt.s32.totalorder %s11, 3
    %p134 = pnand %p132, %p133
    %p135 = pneg %p134
    // Predicated region
    $region9: #{ridge_forward_pallas.2} parent=5 // pred_check
      _
    $region10: #{ridge_forward_pallas.2} parent=5 // pred_check_branch
      %137 = sbr.rel (%p134) target = $region12
    $region11: #{ridge_forward_pallas.2} parent=5 // pred_region
      %s138 = ssub.s32 %s11, 1
      // Predicated region
      $region13: #{ridge_forward_pallas.2} parent=11 // pred_check
        %p139 = pneg %p77
      $region14: #{ridge_forward_pallas.2} parent=11 // pred_check_branch
        %141 = sbr.rel (%p139) target = $region16
      $region15: #{ridge_forward_pallas.2} parent=11 // pred_region
        %s142 = smul.u32 4, %s21
        %p143 = scmp.lt.s32.totalorder %s142, 3
        %s144 = scalar_select %p143, %s142, 3
        %s145 = smul.addr %s144, 8
        %s146 = scalar_lea.vmem %s0, %s145
        %s147 = smul.u32 4, %s21
      $region16: #{ridge_forward_pallas.2} parent=11 // pred_fallthru
        _
      // Predicated region
      $region17: #{ridge_forward_pallas.2} parent=11 // pred_check
        %p148 = pneg %p98
      $region18: #{ridge_forward_pallas.2} parent=11 // pred_check_branch
        %150 = sbr.rel (%p148) target = $region20
      $region19: #{ridge_forward_pallas.2} parent=11 // pred_region
        _
      $region20: #{ridge_forward_pallas.2} parent=11 // pred_fallthru
        _
    $region12: #{ridge_forward_pallas.2} parent=5 // pred_fallthru
      _
    %p151 = scmp.lt.s32.totalorder %s11, 2
    // Predicated region
    $region21: #{ridge_forward_pallas.2} parent=5 // pred_check
      %p152 = pneg %p151
    $region22: #{ridge_forward_pallas.2} parent=5 // pred_check_branch
      %154 = sbr.rel (%p152) target = $region24
    $region23: #{ridge_forward_pallas.2} parent=5 // pred_region
      // Predicated region
      $region25: #{ridge_forward_pallas.2} parent=23 // pred_check
        %p155 = pneg %p45
      $region26: #{ridge_forward_pallas.2} parent=23 // pred_check_branch
        %157 = sbr.rel (%p155) target = $region28
      $region27: #{ridge_forward_pallas.2} parent=23 // pred_region
        %s158 = ssub.s32 2, %s18
        %p159 = scmp.lt.s32.totalorder %s158, 1
        %s160 = scalar_select %p159, %s158, 1
        %s161 = smul.u32 128, %s160
        %p162 = scmp.lt.s32.totalorder %s18, 1
        %s163 = scalar_select %p162, %s18, 1
        %p164 = scmp.lt.s32.totalorder %s19, 0
        %s165 = scalar_select %p164, %s19, 0
        %s166 = sadd.s32 %s165, %s163
        %s167 = smul.addr %s166, 8
        %s168 = scalar_lea.vmem %s2, %s167
        %s169 = ssub.s32 2, %s18
        %p170 = scmp.lt.s32.totalorder %s169, 1
        %s171 = scalar_select %p170, %s169, 1
        %s172 = smul.u32 128, %s171
      $region28: #{ridge_forward_pallas.2} parent=23 // pred_fallthru
        _
    $region24: #{ridge_forward_pallas.2} parent=5 // pred_fallthru
      _
    %p173 = scmp.le.s32.totalorder 1, %s11
    %p174 = scmp.lt.s32.totalorder %s11, 3
    %p175 = pnand %p173, %p174
    %p176 = pneg %p175
    // Predicated region
    $region29: #{ridge_forward_pallas.2} parent=5 // pred_check
      _
    $region30: #{ridge_forward_pallas.2} parent=5 // pred_check_branch
      %178 = sbr.rel (%p175) target = $region32
    $region31: #{ridge_forward_pallas.2} parent=5 // pred_region
      #allocation8 [shape = 'u8[4096]{0}', space=vmem, size = 0x1000, dematerialized = true, scoped, tag = 'FusionAdapter Buffer %fusion.1 = f32[16,32]{1,0:T(8,128)} fusion(%param_2.1, %param_3), kind=kLoop, calls=%fused_computation.1.clone, metadata={op_name="jit(ridge_forward_pallas)/jit(_pad)/pad" stack_frame_id=1}']
      %s179 = ssub.s32 %s11, 1
      %s180 = ssub.s32 2, %s20
      %p181 = scmp.lt.s32.totalorder %s180, 1
      %s182 = scalar_select %p181, %s180, 1
      %s183 = smul.u32 128, %s182
      %p184 = scmp.lt.s32.totalorder %s20, 1
      %s185 = scalar_select %p184, %s20, 1
      %p186 = scmp.lt.s32.totalorder %s21, 0
      %s187 = scalar_select %p186, %s21, 0
      %s188 = sadd.s32 %s187, %s185
      %s189 = smul.addr %s188, 8
      %s190 = scalar_lea.vmem %s2, %s189
      %p191 = pneg %p51
      %p192 = pneg %p48
      %s193 = smul.u32 4, %s21
      %p194 = scmp.lt.s32.totalorder %s193, 3
      %s195 = scalar_select %p194, %s193, 3
      %s196 = smul.addr %s195, 8
      %s197 = scalar_lea.vmem %s0, %s196
      %p198 = pneg %p77
      %p199 = pneg %p74
      %p200 = pneg %p98
      %p201 = pneg %p95
      %p202 = pneg %p124
      %p203 = pneg %p121
      %p204 = scmp.lt.s32.totalorder %s20, 1
      %s205 = scalar_select %p204, %s20, 1
      %s206 = smul.addr %s205, 8
      %s207 = scalar_lea.vmem %s4, %s206
      %s208 = ssub.s32 2, %s20
      %p209 = scmp.lt.s32.totalorder %s208, 1
      %s210 = scalar_select %p209, %s208, 1
      %s211 = smul.u32 128, %s210
      %p212 = scmp.lt.s32.totalorder %s20, 1
      %s213 = scalar_select %p212, %s20, 1
      %p214 = scmp.lt.s32.totalorder %s21, 0
      %s215 = scalar_select %p214, %s21, 0
      %s216 = sadd.s32 %s215, %s213
      %s217 = smul.addr %s216, 8
      %s218 = scalar_lea.vmem %s2, %s217
      %s219 = ssub.s32 2, %s20
      %p220 = scmp.lt.s32.totalorder %s219, 1
      %s221 = scalar_select %p220, %s219, 1
      %s222 = smul.u32 128, %s221
      %s223 = smul.u32 4, %s21
      %p224 = scmp.lt.s32.totalorder %s223, 3
      %s225 = scalar_select %p224, %s223, 3
      %s226 = smul.addr %s225, 8
      %s227 = scalar_lea.vmem %s0, %s226
      %s228 = smul.u32 4, %s21
      %p229 = scmp.lt.s32.totalorder %s20, 1
      %s230 = scalar_select %p229, %s20, 1
      %s231 = smul.addr %s230, 8
      %s232 = scalar_lea.vmem %s4, %s231
      %s233 = ssub.s32 1, %s20
      %p234 = scmp.lt.s32.totalorder %s233, 0
      %s235 = scalar_select %p234, 0, 255
      %v236 = vld [vmem:[%s218] sm:%s235]
      %s237 = ssub.s32 1, %s20
      %v238 = vstv %s237
      %vm239 = vcmp.lt.s32.totalorder %v238, 0
      %v240 = vsel %vm239, %v9, %v236
      %s241 = smul.addr %s20, 8
      %v242 = vlaneseq
      %v243 = vshrl.u32 %v242, 7
      %v244 = vstv %s241
      %v245 = vadd.s32 %v243, %v244
      %vm246 = vcmp.lt.s32.totalorder %v245, 10
      %v247 = vsel %vm246, %v240, %v9
      %s248 = smul.addr %s21, 128
      %v249 = vlaneseq
      %v250 = vand.u32 %v249, 127
      %v251 = vstv %s248
      %v252 = vadd.s32 %v250, %v251
      %vm253 = vcmp.lt.s32.totalorder %v252, 32
      %v254 = vsel %vm253, %v247, %v9
      %256 = vst [vmem:[#allocation8] sm:$0xff] %v254
      %p257 = scmp.eq.s32.totalorder %s21, 0
      // Predicated region
      $region33: #{ridge_forward_pallas.2} parent=31 // pred_check
        %p258 = pneg %p257
      $region34: #{ridge_forward_pallas.2} parent=31 // pred_check_branch
        %260 = sbr.rel (%p258) target = $region36
      $region35: #{ridge_forward_pallas.2} parent=31 // pred_region
        %261 = vst [vmem:[#allocation2] sm:$0xff] 0.0
      $region36: #{ridge_forward_pallas.2} parent=31 // pred_fallthru
        _
      %v262 = vld [vmem:[#allocation2] sm:$0xff]
      %v263 = vld [vmem:[#allocation8] sm:$0xff]
      %v264 = vld [vmem:[%s227] sm:$0xff]
      %v265 = vld [vmem:[%s227 + $0x8] sm:$0xff]
      %v266 = vld [vmem:[%s227 + $0x10] sm:$0xff]
      %v267 = vld [vmem:[%s227 + $0x18] sm:$0xff]
      %vm268 = vcmask 261120
      %v270 = vsel %vm268, %v263, 0
      %272 = vmatprep.subr.mxu0 0.0
      %273 = vmatpush1.msra.mxu0 %v264
      %274 = vmatprep.subr.mxu0 0.0
      %275 = vmatpush1.msra.mxu0 %v265
      %276 = vmatprep.subr.mxu0 0.0
      %277 = vmatpush1.msra.mxu0 %v266
      %278 = vmatprep.subr.mxu0 0.0
      %279 = vmatpush1.msra.mxu0 %v267
      %280 = vmatprep.subr.mxu0 0.0
      %281 = vmatpush1.msra.mxu0 0.0
      %282 = vmatprep.subr.mxu0 0.0
      %283 = vmatpush1.msra.mxu0 0.0
      %284 = vmatprep.subr.mxu0 0.0
      %285 = vmatpush1.msra.mxu0 0.0
      %286 = vmatprep.subr.mxu0 0.0
      %287 = vmatpush1.msra.mxu0 0.0
      %288 = vmatprep.subr.mxu0 0.0
      %289 = vmatpush1.msra.mxu0 0.0
      %290 = vmatprep.subr.mxu0 0.0
      %291 = vmatpush1.msra.mxu0 0.0
      %292 = vmatprep.subr.mxu0 0.0
      %293 = vmatpush1.msra.mxu0 0.0
      %294 = vmatprep.subr.mxu0 0.0
      %295 = vmatpush1.msra.mxu0 0.0
      %296 = vmatprep.subr.mxu0 0.0
      %297 = vmatpush1.msra.mxu0 0.0
      %298 = vmatprep.subr.mxu0 0.0
      %299 = vmatpush1.msra.mxu0 0.0
      %300 = vmatprep.subr.mxu0 0.0
      %301 = vmatpush1.msra.mxu0 0.0
      %302 = vmatprep.subr.mxu0 0.0
      %303 = vmatpush1.msra.mxu0 0.0
      %304 = vmatprep.subr.mxu0 0.0
      %305 = vmatpush1.msra.mxu0 0.0
      %306 = vmatprep.subr.mxu0 0.0
      %307 = vmatpush1.msra.mxu0 0.0
      %308 = vmatprep.subr.mxu0 0.0
      %309 = vmatpush1.msra.mxu0 0.0
      %310 = vmatprep.subr.mxu0 0.0
      %311 = vmatpush1.msra.mxu0 0.0
      %312 = vmatprep.subr.mxu0 0.0
      %313 = vmatpush1.msra.mxu0 0.0
      %314 = vmatprep.subr.mxu0 0.0
      %315 = vmatpush1.msra.mxu0 0.0
      %316 = vmatprep.subr.mxu0 0.0
      %317 = vmatpush1.msra.mxu0 0.0
      %318 = vmatprep.subr.mxu0 0.0
      %319 = vmatpush1.msra.mxu0 0.0
      %320 = vmatprep.subr.mxu0 0.0
      %321 = vmatpush1.msra.mxu0 0.0
      %322 = vmatprep.subr.mxu0 0.0
      %323 = vmatpush1.msra.mxu0 0.0
      %324 = vmatprep.subr.mxu0 0.0
      %325 = vmatpush1.msra.mxu0 0.0
      %326 = vmatprep.subr.mxu0 0.0
      %327 = vmatpush1.msra.mxu0 0.0
      %328 = vmatprep.subr.mxu0 0.0
      %329 = vmatpush1.msra.mxu0 0.0
      %330 = vmatprep.subr.mxu0 0.0
      %331 = vmatpush1.msra.mxu0 0.0
      %332 = vmatprep.subr.mxu0 0.0
      %333 = vmatpush1.msra.mxu0 0.0
      %334 = vmatprep.subr.mxu0 0.0
      %335 = vmatpush1.msra.mxu0 0.0
      %336 = vmatprep.mubr.f32.mxu0 0.0
      %337 = vmatmul.mubr.f32.gmra.mrb[0].mxu0 %v270
      %v338 = vpop.f32.mrb[0].mxu0
      %v339 = vadd.f32 0.0, %v338
      %v340 = vpop.f32.mrb[0].mxu0
      %341 = vdwg.mxu0
      %v342 = vadd.f32 %v262, %v339
      %343 = vst [vmem:[#allocation2] sm:$0xff] %v342
      // Predicated region
      $region37: #{ridge_forward_pallas.2} parent=31 // pred_check
        %p344 = pneg %p257
      $region38: #{ridge_forward_pallas.2} parent=31 // pred_check_branch
        %346 = sbr.rel (%p344) target = $region40
      $region39: #{ridge_forward_pallas.2} parent=31 // pred_region
        %v347 = vld [vmem:[#allocation2] sm:$0xff]
        %v348 = vld [vmem:[%s1] sm:$0x1]
        %v350 = vlaneseq
        %v351 = vshrl.u32 %v350, 7
        %v352 = vsub.s32 0, %v351
        %v353 = vrot.slane %v348, %v352
        %v355 = vadd.f32 %v347, %v353
        %356 = vst [vmem:[%s232] sm:$0xff] %v355
      $region40: #{ridge_forward_pallas.2} parent=31 // pred_fallthru
        _
      %p357 = scmp.lt.s32.totalorder %s20, 1
      %s358 = scalar_select %p357, %s20, 1
      %s359 = smul.addr %s358, 8
      %s360 = scalar_lea.vmem %s4, %s359
      // Predicated region
      $region41: #{ridge_forward_pallas.2} parent=31 // pred_check
        %p361 = pneg %p121
      $region42: #{ridge_forward_pallas.2} parent=31 // pred_check_branch
        %363 = sbr.rel (%p361) target = $region44
      $region43: #{ridge_forward_pallas.2} parent=31 // pred_region
        _
      $region44: #{ridge_forward_pallas.2} parent=31 // pred_fallthru
        _
    $region32: #{ridge_forward_pallas.2} parent=5 // pred_fallthru
      _
    %p364 = scmp.le.s32.totalorder 2, %s11
    // Predicated region
    $region45: #{ridge_forward_pallas.2} parent=5 // pred_check
      %p365 = pneg %p364
    $region46: #{ridge_forward_pallas.2} parent=5 // pred_check_branch
      %367 = sbr.rel (%p365) target = $region48
    $region47: #{ridge_forward_pallas.2} parent=5 // pred_region
      %s368 = ssub.s32 %s11, 2
      // Predicated region
      $region49: #{ridge_forward_pallas.2} parent=47 // pred_check
        %p369 = pneg %p127
      $region50: #{ridge_forward_pallas.2} parent=47 // pred_check_branch
        %371 = sbr.rel (%p369) target = $region52
      $region51: #{ridge_forward_pallas.2} parent=47 // pred_region
        %p372 = scmp.lt.s32.totalorder %s22, 1
        %s373 = scalar_select %p372, %s22, 1
        %s374 = smul.addr %s373, 8
        %s375 = scalar_lea.vmem %s4, %s374
      $region52: #{ridge_forward_pallas.2} parent=47 // pred_fallthru
        _
    $region48: #{ridge_forward_pallas.2} parent=5 // pred_fallthru
      _
  $region6: #{ridge_forward_pallas.2} parent=0 // loop_footer
    %s15 = sadd.s32 1, %s11
  $region7: #{ridge_forward_pallas.2} parent=0 // loop_footer_branch
    %10 = sbr.rel target = $region3
  $region8: #{ridge_forward_pallas.2} parent=0 // loop_exit
    _

</llo_original>
